<compile_context>
chip_gen: v7x
topology: tpu7x:2x2x1
jax: 0.10.0
libtpu: 0.0.40
codegen_flags: <defaults>
</compile_context>

<pallas_src>
import numpy as np
import jax
import jax.numpy as jnp
from jax import lax
from jax.experimental import pallas as pl
from jax.experimental.pallas import tpu as pltpu

NUM_CLASSES = 2
VOCAB_SIZE = 1000
DIM_EMB = 300  # unused: the module never builds the embedding / classifier

# int32 (two's-complement) views of the lowbias32 hash constants.
_H1 = int(np.array([0x7FEB352D], dtype=np.uint32).view(np.int32)[0])
_H2 = int(np.array([0x846CA68B], dtype=np.uint32).view(np.int32)[0])
_GOLD = int(np.array([0x9E3779B9], dtype=np.uint32).view(np.int32)[0])
_EXP_ONE = 0x3F800000  # float32 bit pattern of 1.0


def _mix(x):
    """lowbias32 integer hash, computed entirely in int32 (wrapping mul)."""
    x = x ^ lax.shift_right_logical(x, 16)
    x = x * jnp.int32(_H1)
    x = x ^ lax.shift_right_logical(x, 15)
    x = x * jnp.int32(_H2)
    x = x ^ lax.shift_right_logical(x, 16)
    return x


def _bits_to_uniform(bits_i32):
    """32 random bits -> uniform float32 in [0, 1) via the mantissa trick."""
    mant = lax.shift_right_logical(bits_i32, 9) | jnp.int32(_EXP_ONE)  # [1, 2)
    return lax.bitcast_convert_type(mant, jnp.float32) - 1.0


def nbow_kernel(seed_ref, o_ref):
    # forward(X) ignores X (exactly as in PyTorch), so X never enters the
    # kernel: no HBM traffic, no DMA, no dead load.
    seed = seed_ref[0]

    # One int32 counter per lane of the (8, 128) output vreg tile.
    rows = lax.broadcasted_iota(jnp.int32, o_ref.shape, 0)
    cols = lax.broadcasted_iota(jnp.int32, o_ref.shape, 1)
    ctr = rows * jnp.int32(o_ref.shape[1]) + cols

    # Single PRNG chain: second draw derived from the first.
    bits1 = _mix(ctr ^ seed)
    bits2 = _mix(bits1 ^ jnp.int32(_GOLD))

    u1 = 1.0 - _bits_to_uniform(bits1)  # (0, 1]  -> log-safe
    u2 = _bits_to_uniform(bits2)        # [0, 1)

    # Box-Muller: z ~ N(0, 1).  All in f32 (fast path on v5e as well).
    two_pi = 6.283185307179586
    r = jnp.sqrt(-2.0 * jnp.log(u1))
    o_ref[...] = (r * jnp.cos(two_pi * u2)).astype(o_ref.dtype)


def nbow_forward(x, seed, num_classes=NUM_CLASSES):
    """Pallas equivalent of NBOW.forward(X) -> (num_classes,) float32.

    X is accepted for API parity but — exactly like the PyTorch module — never
    read, so it is not even passed to the kernel (zero data movement for it).
    """
    del x  # forward() ignores X

    padded = pl.pallas_call(
        nbow_kernel,
        out_shape=jax.ShapeDtypeStruct((8, 128), jnp.float32),
        in_specs=[pl.BlockSpec(memory_space=pltpu.MemorySpace.SMEM)],   # seed
        out_specs=pl.BlockSpec(memory_space=pltpu.MemorySpace.VMEM),
    )(seed)
    # (8,128) is one vreg: minimum aligned, unmasked store.  Slice on XLA side.
    return padded[0, :num_classes]


if __name__ == "__main__":
    key = jax.random.PRNGKey(0)
    # X: (batch=2, seq=8) int32 token ids — NBOW forward ignores them anyway.
    x = jax.random.randint(key, (2, 8), minval=0, maxval=VOCAB_SIZE,
                           dtype=jnp.int32)
    # TODO(synk): torch.randn is fresh per call; here the output is a pure
    # function of `seed` — advance the seed externally for new randomness.
    seed = jnp.array([0], dtype=jnp.int32)

    out = nbow_forward(x, seed)
    out = jax.block_until_ready(out)

    assert out.shape == (NUM_CLASSES,)
    assert out.dtype == jnp.float32
    assert bool(jnp.all(jnp.isfinite(out)))
    print("KERNEL_OK")
</pallas_src>

<mosaic_0001>
module attributes {stable_mosaic.version = 11 : i64} {
  func.func @nbow_kernel(%arg0: memref<1xi32, #tpu.memory_space<smem>>, %arg1: memref<8x128xf32, #tpu.memory_space<vmem>>) attributes {dimension_semantics = [], scalar_prefetch = 0 : i64, scratch_operands = 0 : i64, tpu.core_type = #tpu.core_type<tc>} {
    %c0 = arith.constant 0 : index
    %0 = memref.load %arg0[%c0] : memref<1xi32, #tpu.memory_space<smem>>
    %1 = tpu.iota {dimensions = array<i32: 0>} : vector<8x128xi32>
    %2 = tpu.iota {dimensions = array<i32: 1>} : vector<8x128xi32>
    %c128_i32 = arith.constant 128 : i32
    %3 = vector.broadcast %c128_i32 : i32 to vector<8x128xi32>
    %4 = arith.muli %1, %3 : vector<8x128xi32>
    %5 = arith.addi %4, %2 : vector<8x128xi32>
    %6 = vector.broadcast %0 : i32 to vector<8x128xi32>
    %7 = arith.xori %5, %6 : vector<8x128xi32>
    %c16_i32 = arith.constant 16 : i32
    %8 = vector.broadcast %c16_i32 : i32 to vector<8x128xi32>
    %9 = arith.shrui %7, %8 : vector<8x128xi32>
    %10 = arith.xori %7, %9 : vector<8x128xi32>
    %c2146121005_i32 = arith.constant 2146121005 : i32
    %11 = vector.broadcast %c2146121005_i32 : i32 to vector<8x128xi32>
    %12 = arith.muli %10, %11 : vector<8x128xi32>
    %c15_i32 = arith.constant 15 : i32
    %13 = vector.broadcast %c15_i32 : i32 to vector<8x128xi32>
    %14 = arith.shrui %12, %13 : vector<8x128xi32>
    %15 = arith.xori %12, %14 : vector<8x128xi32>
    %c-2073254261_i32 = arith.constant -2073254261 : i32
    %16 = vector.broadcast %c-2073254261_i32 : i32 to vector<8x128xi32>
    %17 = arith.muli %15, %16 : vector<8x128xi32>
    %c16_i32_0 = arith.constant 16 : i32
    %18 = vector.broadcast %c16_i32_0 : i32 to vector<8x128xi32>
    %19 = arith.shrui %17, %18 : vector<8x128xi32>
    %20 = arith.xori %17, %19 : vector<8x128xi32>
    %c-1640531527_i32 = arith.constant -1640531527 : i32
    %21 = vector.broadcast %c-1640531527_i32 : i32 to vector<8x128xi32>
    %22 = arith.xori %20, %21 : vector<8x128xi32>
    %c16_i32_1 = arith.constant 16 : i32
    %23 = vector.broadcast %c16_i32_1 : i32 to vector<8x128xi32>
    %24 = arith.shrui %22, %23 : vector<8x128xi32>
    %25 = arith.xori %22, %24 : vector<8x128xi32>
    %c2146121005_i32_2 = arith.constant 2146121005 : i32
    %26 = vector.broadcast %c2146121005_i32_2 : i32 to vector<8x128xi32>
    %27 = arith.muli %25, %26 : vector<8x128xi32>
    %c15_i32_3 = arith.constant 15 : i32
    %28 = vector.broadcast %c15_i32_3 : i32 to vector<8x128xi32>
    %29 = arith.shrui %27, %28 : vector<8x128xi32>
    %30 = arith.xori %27, %29 : vector<8x128xi32>
    %c-2073254261_i32_4 = arith.constant -2073254261 : i32
    %31 = vector.broadcast %c-2073254261_i32_4 : i32 to vector<8x128xi32>
    %32 = arith.muli %30, %31 : vector<8x128xi32>
    %c16_i32_5 = arith.constant 16 : i32
    %33 = vector.broadcast %c16_i32_5 : i32 to vector<8x128xi32>
    %34 = arith.shrui %32, %33 : vector<8x128xi32>
    %35 = arith.xori %32, %34 : vector<8x128xi32>
    %c9_i32 = arith.constant 9 : i32
    %36 = vector.broadcast %c9_i32 : i32 to vector<8x128xi32>
    %37 = arith.shrui %20, %36 : vector<8x128xi32>
    %c1065353216_i32 = arith.constant 1065353216 : i32
    %38 = vector.broadcast %c1065353216_i32 : i32 to vector<8x128xi32>
    %39 = arith.ori %37, %38 : vector<8x128xi32>
    %40 = tpu.bitcast %39 : vector<8x128xi32> -> vector<8x128xf32>
    %cst = arith.constant 1.000000e+00 : f32
    %41 = vector.broadcast %cst : f32 to vector<8x128xf32>
    %42 = arith.subf %40, %41 : vector<8x128xf32>
    %cst_6 = arith.constant 1.000000e+00 : f32
    %43 = vector.broadcast %cst_6 : f32 to vector<8x128xf32>
    %44 = arith.subf %43, %42 : vector<8x128xf32>
    %c9_i32_7 = arith.constant 9 : i32
    %45 = vector.broadcast %c9_i32_7 : i32 to vector<8x128xi32>
    %46 = arith.shrui %35, %45 : vector<8x128xi32>
    %c1065353216_i32_8 = arith.constant 1065353216 : i32
    %47 = vector.broadcast %c1065353216_i32_8 : i32 to vector<8x128xi32>
    %48 = arith.ori %46, %47 : vector<8x128xi32>
    %49 = tpu.bitcast %48 : vector<8x128xi32> -> vector<8x128xf32>
    %cst_9 = arith.constant 1.000000e+00 : f32
    %50 = vector.broadcast %cst_9 : f32 to vector<8x128xf32>
    %51 = arith.subf %49, %50 : vector<8x128xf32>
    %52 = math.log %44 : vector<8x128xf32>
    %cst_10 = arith.constant -2.000000e+00 : f32
    %53 = vector.broadcast %cst_10 : f32 to vector<8x128xf32>
    %54 = arith.mulf %53, %52 : vector<8x128xf32>
    %55 = math.sqrt %54 : vector<8x128xf32>
    %cst_11 = arith.constant 6.28318548 : f32
    %56 = vector.broadcast %cst_11 : f32 to vector<8x128xf32>
    %57 = arith.mulf %56, %51 : vector<8x128xf32>
    %58 = math.cos %57 : vector<8x128xf32>
    %59 = arith.mulf %55, %58 : vector<8x128xf32>
    %c0_12 = arith.constant 0 : index
    %c0_13 = arith.constant 0 : index
    %60 = vector.load %arg1[%c0_12, %c0_13] : memref<8x128xf32, #tpu.memory_space<vmem>>, vector<8x128xf32>
    tpu.vector_store %arg1[%c0_12, %c0_13], %59 {strides = array<i32>} : memref<8x128xf32, #tpu.memory_space<vmem>>, vector<8x128xf32>,
    return
  }
}

</mosaic_0001>

<llo_original>
// kernel: tpu_custom_call.1
$region0: #{tpu_custom_call.1}
  #allocation0 [shape = 'u32[]', space=smem, size = 0x4, offset = 0x4, fixed_abs, tag = 'smem constant byte address 0x4 - core index']
  #allocation1 [shape = 'u32[144,128]{1,0:T(1,128)}', space=vmem, size = 0x12000, scoped, tag = 'internal scratch']
  #allocation2 [shape = 's32[1]{0:T(128)S(6)}', space=smem, size = 0x200, scoped, tag = 'scoped memory for tpu_custom_call.1']
  %s0 = inlined_call_operand.<no memory space> [shape: s32[1], index: 0, kind: input, shape index: {}]
  %s1 = inlined_call_operand.hbm [shape: f32[8,128], index: 1, kind: output, shape index: {}]
  %s2 = sld [smem:[#allocation0]]
  $region14: #{tpu_custom_call.1} parent=0
    _
  %s4 = ssub.s32 1, %s2
  %s5 = scalar_select 0, %s4, %s2
  %6 = sst [smem:[#allocation2]] %s0
  $region1: #{tpu_custom_call.1} parent=0
    #allocation3 [shape = 'u8[4096]{0}', space=vmem, size = 0x1000, scoped, tag = 'output window, operand 0, single buffered']
    #allocation4 [shape = 's32[1]{0}', space=sflag, size = 0x4, scoped, tag = 'scoped memory for tpu_custom_call.1']
    %7 = vsyncpa [#allocation4], 0
    // Predicated region
    $region2: #{tpu_custom_call.1} parent=1 // pred_check
      _
    $region3: #{tpu_custom_call.1} parent=1 // pred_check_branch
      %9 = sbr.rel (0) target = $region5
    $region4: #{tpu_custom_call.1} parent=1 // pred_region
      _
    $region5: #{tpu_custom_call.1} parent=1 // pred_fallthru
      _
    %s10 = sld [smem:[#allocation2]]
    %v11 = vlaneseq
    %v12 = vshrl.u32 %v11, 7
    %v13 = vlaneseq
    %v14 = vand.u32 %v13, 127
    %v15 = vmul.u32 %v12, 128
    %v16 = vadd.s32 %v15, %v14
    %v17 = vstv %s10
    %v18 = vxor.u32 %v16, %v17
    %v19 = vshrl.u32 %v18, 16
    %v20 = vxor.u32 %v18, %v19
    %v21 = vmul.u32 %v20, 2146121005
    %v22 = vshrl.u32 %v21, 15
    %v23 = vxor.u32 %v21, %v22
    %v24 = vmul.u32 %v23, 2221713035
    %v25 = vshrl.u32 %v24, 16
    %v26 = vxor.u32 %v24, %v25
    %v27 = vxor.u32 %v26, 2654435769
    %v28 = vshrl.u32 %v27, 16
    %v29 = vxor.u32 %v27, %v28
    %v30 = vmul.u32 %v29, 2146121005
    %v31 = vshrl.u32 %v30, 15
    %v32 = vxor.u32 %v30, %v31
    %v33 = vmul.u32 %v32, 2221713035
    %v34 = vshrl.u32 %v33, 16
    %v35 = vxor.u32 %v33, %v34
    %v36 = vshrl.u32 %v26, 9
    %v37 = vor.u32 %v36, 1065353216
    %v39 = vsub.f32 %v37, 1.0
    %v40 = vsub.f32 1.0, %v39
    %v41 = vshrl.u32 %v35, 9
    %v42 = vor.u32 %v41, 1065353216
    %v44 = vsub.f32 %v42, 1.0
    %v45 = vlog2.pop %v40
    %v46 = vmul.f32 %v45, 0.6931472
    %v47 = vmul.f32 %v46, -2.0
    %v48 = vrsqrt.pop %v47
    %v49 = vmul.f32 %v47, %v48
    %vm50 = vcmp.eq.f32.partialorder %v47, inf
    %v51 = vsel %vm50, %v47, %v49
    %vm52 = vcmp.eq.f32.partialorder %v47, 0.0
    %v53 = vand.u32 %v47, 2147483648
    %v54 = vsel %vm52, %v53, %v51
    %v55 = vmul.f32 %v44, 6.2831855
    %v56 = vand.u32 2147483647, %v55
    %vm57 = vcmp.le.f32.partialorder %v56, 0.7853982
    %vm58 = vcmp.lt.s32.totalorder %v55, 0
    %v59 = vand.u32 %v55, 2139095040
    %v60 = vshrl.u32 %v59, 23
    %v61 = vsub.s32 %v60, 127
    %v62 = vand.u32 2147483647, %v55
    %v63 = vand.u32 %v62, 8388607
    %v64 = vor.u32 %v63, 8388608
    %v65 = vsub.s32 0, %v64
    %v66 = vadd.s32 %v61, 1
    %vm67 = vcmp.gt.s32.totalorder %v66, 0
    %v68 = vsel %vm67, %v66, 0
    %v69 = vshrl.u32 %v68, 5
    %v70 = vand.u32 %v68, 31
    %v71 = vsub.s32 32, %v70
    %v72 = vshrl.u32 683565275, %v71
    %v73 = vshll.u32 683565275, %v70
    %v74 = vshrl.u32 2475754826, %v71
    %v75 = vor.u32 %v73, %v74
    %v76 = vshll.u32 2475754826, %v70
    %v77 = vshrl.u32 2131351028, %v71
    %v78 = vor.u32 %v76, %v77
    %v79 = vshll.u32 2131351028, %v70
    %v80 = vshrl.u32 2102212464, %v71
    %v81 = vor.u32 %v79, %v80
    %v82 = vshll.u32 2102212464, %v70
    %v83 = vshrl.u32 920167782, %v71
    %v84 = vor.u32 %v82, %v83
    %v85 = vshll.u32 920167782, %v70
    %v86 = vshrl.u32 1326507024, %v71
    %v87 = vor.u32 %v85, %v86
    %vm88 = vcmp.lt.s32.totalorder %v69, 1
    %vm89 = vcmp.lt.s32.totalorder %v69, 2
    %vm90 = vcmp.lt.s32.totalorder %v69, 3
    %vm91 = vcmp.lt.s32.totalorder %v69, 4
    %v92 = vsel %vm88, %v72, %v75
    %v93 = vsel %vm91, %v81, 2102212464
    %v94 = vsel %vm90, %v78, %v93
    %v95 = vsel %vm89, %v92, %v94
    %v96 = vsel %vm88, %v75, %v78
    %v97 = vsel %vm91, %v84, 920167782
    %v98 = vsel %vm90, %v81, %v97
    %v99 = vsel %vm89, %v96, %v98
    %v100 = vsel %vm88, %v78, %v81
    %v101 = vsel %vm91, %v87, 1326507024
    %v102 = vsel %vm90, %v84, %v101
    %v103 = vsel %vm89, %v100, %v102
    %v104 = vshll.u32 %v64, 8
    %v105 = vmul.u32.u64.compose %v104, %v103
    %v106 = vextract.low.u32 %v105
    %v107 = vextract.high.u32 %v105
    %v108 = vmul.u32.u64.compose %v104, %v99
    %v109 = vextract.low.u32 %v108
    %v110 = vextract.high.u32 %v108
    %v111 = vmul.u32 %v104, %v95
    %v112 = vadd.s32 %v107, %v109
    %vm113 = vc.u32 %v107, %v109
    %v114 = vadd.s32 %v110, 1
    %v115 = vsel %vm113, %v114, %v110
    %v116 = vadd.s32 %v111, %v115
    %v117 = vadd.s32 %v116, 536870912
    %v118 = vshrl.u32 %v117, 30
    %v119 = vshll.u32 %v118, 30
    %v120 = vsub.s32 %v116, %v119
    %vm121 = vcmp.lt.s32.totalorder %v120, 0
    %v122 = vsub.s32 0, %v120
    %v123 = vsel %vm121, %v122, %v120
    %v124 = vclz %v123
    %v125 = vsub.s32 %v124, 2
    %vm126 = vcmp.gt.s32.totalorder 0, %v125
    %v127 = vsel %vm126, 0, %v125
    %v128 = vsub.s32 32, %v127
    %v129 = vshll.u32 %v120, %v127
    %v130 = vshrl.u32 %v112, %v128
    %v131 = vor.u32 %v129, %v130
    %v132 = vsub.s32 4294967266, %v127
    %v133 = vadd.s32 %v132, 127
    %v134 = vshll.u32 %v133, 23
    %v135 = vor.u32 4788187, %v134
    %v136 = vand.u32 2147483647, %v135
    %v138 = vcvt.s32.f32 %v131
    %v139 = vmul.f32 %v138, %v136
    %v140 = vxor.u32 %v139, 2147483648
    %v141 = vsel %vm58, %v140, %v139
    %v142 = vsub.s32 4, %v118
    %v143 = vsel %vm58, %v142, %v118
    %v144 = vsel %vm57, %v55, %v141
    %v145 = vsel %vm57, 0, %v143
    %v146 = vcosq.f32.pop %v144
    %v147 = vsinq.f32.pop %v144
    %vm148 = vweird.f32 %v55
    %v149 = vand.u32 %v145, 3
    %vm150 = vcmp.lt.s32.totalorder %v149, 2
    %vm151 = vcmp.eq.s32.totalorder %v149, 0
    %v152 = vxor.u32 %v147, 2147483648
    %v153 = vsel %vm151, %v146, %v152
    %vm154 = vcmp.eq.s32.totalorder %v149, 2
    %v155 = vxor.u32 %v146, 2147483648
    %v156 = vsel %vm154, %v155, %v147
    %v157 = vsel %vm150, %v153, %v156
    %v158 = vsel %vm148, nan, %v157
    %v159 = vmul.f32 %v54, %v158
    %160 = vst [vmem:[#allocation3] sm:$0xff] %v159
    // Predicated region
    $region6: #{tpu_custom_call.1} parent=1 // pred_check
      _
    $region7: #{tpu_custom_call.1} parent=1 // pred_check_branch
      %162 = sbr.rel (0) target = $region9
    $region8: #{tpu_custom_call.1} parent=1 // pred_region
      %s164 = ssub.s32 128, 128
      %165 = vsyncadd [#allocation4], %s164
      %s167 = sshll.u32 [#allocation3], 4
      %s168 = int_to_ptr.vmem [resolvable:$true] %s167
      %170 = dma.vmem_to_hbm [thread:$0]  %s168, 128, %s1, [#allocation4]
    $region9: #{tpu_custom_call.1} parent=1 // pred_fallthru
      _
    // Predicated region
    $region10: #{tpu_custom_call.1} parent=1 // pred_check
      _
    $region11: #{tpu_custom_call.1} parent=1 // pred_check_branch
      %172 = sbr.rel (0) target = $region13
    $region12: #{tpu_custom_call.1} parent=1 // pred_region
      %173 = dma.done [#allocation4], 128
    $region13: #{tpu_custom_call.1} parent=1 // pred_fallthru
      _
    %174 = vsyncpa [#allocation4], 1

</llo_original>
